<compile_context>
chip_gen: v7x
topology: tpu7x:2x2x1
jax: 0.10.0
libtpu: 0.0.40
codegen_flags: <defaults>
</compile_context>

<pallas_src>
import functools

import jax
import jax.numpy as jnp
from jax.experimental import pallas as pl
from jax.experimental.pallas import tpu as pltpu


def _round_up(a, b):
    return (a + b - 1) // b * b


def _prenet_kernel(x_ref, *rest, n_layers, apply_dropout, keep_threshold, inv_keep):
    """Fused PreNet: (Linear -> ReLU -> Dropout) x n_layers on one row tile.

    x_ref : (Rt, Cin_pad) f32
    rest  : per layer  w_l (Cin_pad_l, C_pad) bf16,
                       b_l (1, C_pad) f32,
                       [m_l (Rt, C_pad) uint32 random bits  -- only if dropout]
            followed by o_ref (Rt, C_pad) f32
    """
    o_ref = rest[-1]
    per_layer = 3 if apply_dropout else 2
    w_refs = [rest[per_layer * l + 0] for l in range(n_layers)]
    b_refs = [rest[per_layer * l + 1] for l in range(n_layers)]
    m_refs = [rest[per_layer * l + 2] for l in range(n_layers)] if apply_dropout else None

    h = x_ref[...]                                             # (Rt, Cin_pad) f32
    for l in range(n_layers):
        # bf16 MXU inputs, f32 accumulation.
        y = jnp.dot(h.astype(jnp.bfloat16), w_refs[l][...],
                    preferred_element_type=jnp.float32)        # (Rt, C_pad)
        y = y + b_refs[l][...]
        y = jnp.maximum(y, 0.0)                                # ReLU
        if apply_dropout:
            keep = m_refs[l][...] >= jnp.uint32(keep_threshold)  # P(keep) = 1 - p
            y = jnp.where(keep, y * jnp.float32(inv_keep), jnp.float32(0.0))
        h = y
    o_ref[...] = h.astype(o_ref.dtype)


def init_prenet_params(key, channels, in_dim, depth):
    """Synthetic parameters mirroring PreNet.__init__ (nn.Linear stack).

    PyTorch nn.Linear stores weight as (out, in); we keep the (in, out)
    transpose so the kernel computes y = x @ w + b directly.
    """
    sizes = [in_dim] + [channels] * depth
    params = []
    for cin, cout in zip(sizes[:-1], sizes[1:]):
        key, kw, kb = jax.random.split(key, 3)
        w = 0.1 * jax.random.normal(kw, (cin, cout), jnp.float32)
        b = 0.1 * jax.random.normal(kb, (cout,), jnp.float32)
        params.append((w, b))
    return params


def prenet_forward(x, params, prenet_dropout, seed=0, max_rows_per_tile=512):
    """x: (..., in_dim). Returns (..., channels), f32.

    prenet_dropout is treated as a compile-time constant (hyperparameter).
    """
    # TODO(synk): dropout masks come from jax.random, not torch's RNG stream,
    # so masks are iid-Bernoulli-equivalent but not bit-identical to PyTorch.
    lead = x.shape[:-1]
    in_dim = x.shape[-1]
    M = 1
    for d in lead:
        M *= int(d)
    depth = len(params)
    channels = params[-1][1].shape[0]

    LANE = 128
    cin_pad = _round_up(in_dim, LANE)
    c_pad = _round_up(channels, LANE)

    # Row tiling over flattened (batch * time) rows.
    Rt = min(max_rows_per_tile, _round_up(M, 8))
    M_pad = _round_up(M, Rt)
    num_tiles = M_pad // Rt

    x2 = x.reshape(M, in_dim).astype(jnp.float32)
    x2 = jnp.pad(x2, ((0, M_pad - M), (0, cin_pad - in_dim)))

    p = float(prenet_dropout)
    apply_dropout = p > 0.0
    keep_threshold = min(int(round(p * 4294967296.0)), 4294967295)
    inv_keep = (1.0 / (1.0 - p)) if apply_dropout else 1.0

    # Per-layer dropout bits, generated once outside the kernel and streamed
    # through the same row-tiled pipeline as the activations.
    drop_key = jax.random.PRNGKey(int(seed))

    # Lane-padded, bf16 weights + f32 biases; zero padding keeps padded
    # channels exactly zero through ReLU/dropout so results are unchanged.
    ops = []
    in_specs = [pl.BlockSpec((Rt, cin_pad), lambda i: (i, 0))]
    for li, (w, b) in enumerate(params):
        cin, cout = w.shape
        cin_p = cin_pad if li == 0 else c_pad
        w_p = jnp.zeros((cin_p, c_pad), jnp.float32)
        w_p = w_p.at[:cin, :cout].set(w).astype(jnp.bfloat16)
        b_p = jnp.zeros((1, c_pad), jnp.float32).at[0, :cout].set(b)
        ops += [w_p, b_p]
        in_specs += [pl.BlockSpec((cin_p, c_pad), lambda i: (0, 0)),
                     pl.BlockSpec((1, c_pad), lambda i: (0, 0))]
        if apply_dropout:
            bits = jax.random.bits(jax.random.fold_in(drop_key, li),
                                   (M_pad, c_pad), jnp.uint32)
            ops.append(bits)
            in_specs.append(pl.BlockSpec((Rt, c_pad), lambda i: (i, 0)))

    kernel = functools.partial(
        _prenet_kernel, n_layers=depth, apply_dropout=apply_dropout,
        keep_threshold=keep_threshold, inv_keep=inv_keep)

    out = pl.pallas_call(
        kernel,
        out_shape=jax.ShapeDtypeStruct((M_pad, c_pad), jnp.float32),
        grid_spec=pltpu.PrefetchScalarGridSpec(
            num_scalar_prefetch=0,
            grid=(num_tiles,),
            in_specs=in_specs,
            out_specs=pl.BlockSpec((Rt, c_pad), lambda i: (i, 0)),
        ),
        compiler_params=pltpu.CompilerParams(
            dimension_semantics=("parallel",)),
    )(x2, *ops)

    return out[:M, :channels].reshape(*lead, channels)


def _reference_forward(x, params):
    """Pure-JAX f32 reference for the p == 0 case (dropout is then identity)."""
    h = x.astype(jnp.float32)
    for w, b in params:
        h = jnp.maximum(h @ w + b, 0.0)
    return h


if __name__ == "__main__":
    # Small, module-consistent shapes: batch=2, T=16, in_dim=8,
    # hidden channels=32, depth=2 (typical prenet depth).
    N, T, in_dim = 2, 16, 8
    channels, depth = 32, 2

    key = jax.random.PRNGKey(0)
    key, kx = jax.random.split(key)
    x = jax.random.normal(kx, (N, T, in_dim), jnp.float32)
    params = init_prenet_params(key, channels, in_dim, depth)

    # 1) prenet_dropout = 0.0: dropout is identity -> compare against the
    #    pure-f32 reference (tolerance covers the bf16 MXU inputs).
    out0 = jax.block_until_ready(prenet_forward(x, params, prenet_dropout=0.0))
    ref0 = _reference_forward(x, params)
    assert out0.shape == (N, T, channels)
    assert jnp.allclose(out0, ref0, atol=1e-2, rtol=1e-2), "mismatch vs reference (p=0)"

    # 2) prenet_dropout = 0.5: dropout always applied (training=True semantics).
    out5 = jax.block_until_ready(
        prenet_forward(x, params, prenet_dropout=0.5, seed=123))
    assert out5.shape == (N, T, channels)
    assert bool(jnp.all(jnp.isfinite(out5)))
    # Dropout must actually change the output and zero a sizable fraction.
    assert not bool(jnp.allclose(out5, out0))
    zero_frac = float(jnp.mean(out5 == 0.0))
    assert 0.1 < zero_frac < 1.0

    print("KERNEL_OK")
</pallas_src>

<mosaic_0001>
module attributes {stable_mosaic.version = 11 : i64} {
  func.func @_prenet_kernel(%arg0: i32, %arg1: memref<32x128xf32, #tpu.memory_space<vmem>>, %arg2: memref<128x128xbf16, #tpu.memory_space<vmem>>, %arg3: memref<1x128xf32, #tpu.memory_space<vmem>>, %arg4: memref<128x128xbf16, #tpu.memory_space<vmem>>, %arg5: memref<1x128xf32, #tpu.memory_space<vmem>>, %arg6: memref<32x128xf32, #tpu.memory_space<vmem>>) attributes {dimension_semantics = [#tpu.dimension_semantics<parallel>], iteration_bounds = array<i64: 1>, scalar_prefetch = 0 : i64, scratch_operands = 0 : i64, tpu.core_type = #tpu.core_type<tc>, window_params = [{transform_indices = @transform_0, window_bounds = array<i64: 32, 128>}, {pipeline_mode = #tpu.pipeline_mode<synchronous>, transform_indices = @transform_1, window_bounds = array<i64: 128, 128>}, {pipeline_mode = #tpu.pipeline_mode<synchronous>, transform_indices = @transform_2, window_bounds = array<i64: 1, 128>}, {pipeline_mode = #tpu.pipeline_mode<synchronous>, transform_indices = @transform_3, window_bounds = array<i64: 128, 128>}, {pipeline_mode = #tpu.pipeline_mode<synchronous>, transform_indices = @transform_4, window_bounds = array<i64: 1, 128>}, {transform_indices = @transform_5, window_bounds = array<i64: 32, 128>}]} {
    %c0 = arith.constant 0 : index
    %c0_0 = arith.constant 0 : index
    %0 = vector.load %arg1[%c0, %c0_0] : memref<32x128xf32, #tpu.memory_space<vmem>>, vector<32x128xf32>
    %1 = arith.truncf %0 : vector<32x128xf32> to vector<32x128xbf16>
    %c0_1 = arith.constant 0 : index
    %c0_2 = arith.constant 0 : index
    %2 = vector.load %arg2[%c0_1, %c0_2] : memref<128x128xbf16, #tpu.memory_space<vmem>>, vector<128x128xbf16>
    %cst = arith.constant dense<0.000000e+00> : vector<32x128xf32>
    %3 = tpu.matmul %1, %2, %cst {dimension_numbers = #tpu.dot_dimension_numbers<[1], [0], [0], [1], [0, 0, 1, 1], [], []>} : vector<32x128xbf16>, vector<128x128xbf16>, vector<32x128xf32> -> vector<32x128xf32>
    %c0_3 = arith.constant 0 : index
    %c0_4 = arith.constant 0 : index
    %4 = vector.load %arg3[%c0_3, %c0_4] : memref<1x128xf32, #tpu.memory_space<vmem>>, vector<1x128xf32>
    %5 = vector.broadcast %4 : vector<1x128xf32> to vector<32x128xf32>
    %6 = arith.addf %3, %5 : vector<32x128xf32>
    %cst_5 = arith.constant 0.000000e+00 : f32
    %7 = vector.broadcast %cst_5 : f32 to vector<32x128xf32>
    %8 = arith.maximumf %6, %7 : vector<32x128xf32>
    %9 = arith.truncf %8 : vector<32x128xf32> to vector<32x128xbf16>
    %c0_6 = arith.constant 0 : index
    %c0_7 = arith.constant 0 : index
    %10 = vector.load %arg4[%c0_6, %c0_7] : memref<128x128xbf16, #tpu.memory_space<vmem>>, vector<128x128xbf16>
    %cst_8 = arith.constant dense<0.000000e+00> : vector<32x128xf32>
    %11 = tpu.matmul %9, %10, %cst_8 {dimension_numbers = #tpu.dot_dimension_numbers<[1], [0], [0], [1], [0, 0, 1, 1], [], []>} : vector<32x128xbf16>, vector<128x128xbf16>, vector<32x128xf32> -> vector<32x128xf32>
    %c0_9 = arith.constant 0 : index
    %c0_10 = arith.constant 0 : index
    %12 = vector.load %arg5[%c0_9, %c0_10] : memref<1x128xf32, #tpu.memory_space<vmem>>, vector<1x128xf32>
    %13 = vector.broadcast %12 : vector<1x128xf32> to vector<32x128xf32>
    %14 = arith.addf %11, %13 : vector<32x128xf32>
    %cst_11 = arith.constant 0.000000e+00 : f32
    %15 = vector.broadcast %cst_11 : f32 to vector<32x128xf32>
    %16 = arith.maximumf %14, %15 : vector<32x128xf32>
    %c0_12 = arith.constant 0 : index
    %c0_13 = arith.constant 0 : index
    %17 = vector.load %arg6[%c0_12, %c0_13] : memref<32x128xf32, #tpu.memory_space<vmem>>, vector<32x128xf32>
    tpu.vector_store %arg6[%c0_12, %c0_13], %16 {strides = array<i32>} : memref<32x128xf32, #tpu.memory_space<vmem>>, vector<32x128xf32>,
    return
  }
  func.func @transform_0(%arg0: i32) -> (i32, i32) {
    %c0_i32 = arith.constant 0 : i32
    %c0_i32_0 = arith.constant 0 : i32
    return %arg0, %c0_i32 : i32, i32
  }
  func.func @transform_1(%arg0: i32) -> (i32, i32) {
    %c0_i32 = arith.constant 0 : i32
    %c0_i32_0 = arith.constant 0 : i32
    %c0_i32_1 = arith.constant 0 : i32
    return %c0_i32, %c0_i32_0 : i32, i32
  }
  func.func @transform_2(%arg0: i32) -> (i32, i32) {
    %c0_i32 = arith.constant 0 : i32
    %c0_i32_0 = arith.constant 0 : i32
    %c0_i32_1 = arith.constant 0 : i32
    return %c0_i32, %c0_i32_0 : i32, i32
  }
  func.func @transform_3(%arg0: i32) -> (i32, i32) {
    %c0_i32 = arith.constant 0 : i32
    %c0_i32_0 = arith.constant 0 : i32
    %c0_i32_1 = arith.constant 0 : i32
    return %c0_i32, %c0_i32_0 : i32, i32
  }
  func.func @transform_4(%arg0: i32) -> (i32, i32) {
    %c0_i32 = arith.constant 0 : i32
    %c0_i32_0 = arith.constant 0 : i32
    %c0_i32_1 = arith.constant 0 : i32
    return %c0_i32, %c0_i32_0 : i32, i32
  }
  func.func @transform_5(%arg0: i32) -> (i32, i32) {
    %c0_i32 = arith.constant 0 : i32
    %c0_i32_0 = arith.constant 0 : i32
    return %arg0, %c0_i32 : i32, i32
  }
}

</mosaic_0001>

<llo_original>
// kernel: tpu_custom_call.1
$region0: #{tpu_custom_call.1}
  #allocation0 [shape = 'u32[]', space=smem, size = 0x4, offset = 0x4, fixed_abs, tag = 'smem constant byte address 0x4 - core index']
  #allocation1 [shape = 'u32[144,128]{1,0:T(1,128)}', space=vmem, size = 0x12000, scoped, tag = 'internal scratch']
  %s0 = inlined_call_operand.hbm [shape: f32[32,128], index: 0, kind: input, shape index: {}]
  %s1 = inlined_call_operand.hbm [shape: bf16[128,128], index: 1, kind: input, shape index: {}]
  %s2 = inlined_call_operand.vmem [shape: f32[1,128], index: 2, kind: input, shape index: {}]
  %s3 = inlined_call_operand.hbm [shape: bf16[128,128], index: 3, kind: input, shape index: {}]
  %s4 = inlined_call_operand.vmem [shape: f32[1,128], index: 4, kind: input, shape index: {}]
  %s5 = inlined_call_operand.hbm [shape: f32[32,128], index: 5, kind: output, shape index: {}]
  %s6 = sld [smem:[#allocation0]]
  $region42: #{tpu_custom_call.1} parent=0
    _
  %s8 = ssub.s32 1, %s6
  %s9 = scalar_select 0, %s8, %s6
  $region1: #{tpu_custom_call.1} parent=0
    #allocation2 [shape = 'u8[16384]{0}', space=vmem, size = 0x4000, scoped, tag = 'input window, operand 0, single buffered']
    #allocation3 [shape = 's32[1]{0}', space=sflag, size = 0x4, scoped, tag = 'scoped memory for tpu_custom_call.1']
    #allocation4 [shape = 's32[1]{0}', space=sflag, size = 0x4, scoped, tag = 'scoped memory for tpu_custom_call.1']
    #allocation5 [shape = 'u8[32768]{0}', space=vmem, size = 0x8000, scoped, tag = 'input window, operand 1, single buffered']
    #allocation6 [shape = 's32[1]{0}', space=sflag, size = 0x4, scoped, tag = 'scoped memory for tpu_custom_call.1']
    #allocation7 [shape = 'u8[32768]{0}', space=vmem, size = 0x8000, scoped, tag = 'input window, operand 3, single buffered']
    #allocation8 [shape = 'u8[16384]{0}', space=vmem, size = 0x4000, scoped, tag = 'output window, operand 0, single buffered']
    %10 = vsyncpa [#allocation3], 0
    %11 = vsyncpa [#allocation6], 0
    %12 = vsyncpa [#allocation4], 0
    // Predicated region
    $region2: #{tpu_custom_call.1} parent=1 // pred_check
      _
    $region3: #{tpu_custom_call.1} parent=1 // pred_check_branch
      %14 = sbr.rel (0) target = $region5
    $region4: #{tpu_custom_call.1} parent=1 // pred_region
      %s16 = ssub.s32 512, 512
      %17 = vsyncadd [#allocation3], %s16
      %s18 = sshll.u32 [#allocation2], 4
      %s19 = int_to_ptr.vmem [resolvable:$true] %s18
      %24 = dma.hbm_to_vmem [thread:$0]  %s0, 512, %s19, [#allocation3], 128, 128, 8
    $region5: #{tpu_custom_call.1} parent=1 // pred_fallthru
      _
    // Predicated region
    $region6: #{tpu_custom_call.1} parent=1 // pred_check
      _
    $region7: #{tpu_custom_call.1} parent=1 // pred_check_branch
      %26 = sbr.rel (0) target = $region9
    $region8: #{tpu_custom_call.1} parent=1 // pred_region
      %s28 = ssub.s32 1024, 1024
      %29 = vsyncadd [#allocation6], %s28
      %s30 = sshll.u32 [#allocation5], 4
      %s31 = int_to_ptr.vmem [resolvable:$true] %s30
      %36 = dma.hbm_to_vmem [thread:$0]  %s1, 1024, %s31, [#allocation6], 64, 64, 4
    $region9: #{tpu_custom_call.1} parent=1 // pred_fallthru
      _
    // Predicated region
    $region10: #{tpu_custom_call.1} parent=1 // pred_check
      _
    $region11: #{tpu_custom_call.1} parent=1 // pred_check_branch
      %38 = sbr.rel (0) target = $region13
    $region12: #{tpu_custom_call.1} parent=1 // pred_region
      _
    $region13: #{tpu_custom_call.1} parent=1 // pred_fallthru
      _
    // Predicated region
    $region14: #{tpu_custom_call.1} parent=1 // pred_check
      _
    $region15: #{tpu_custom_call.1} parent=1 // pred_check_branch
      %40 = sbr.rel (0) target = $region17
    $region16: #{tpu_custom_call.1} parent=1 // pred_region
      %s42 = ssub.s32 1024, 1024
      %43 = vsyncadd [#allocation6], %s42
      %s44 = sshll.u32 [#allocation7], 4
      %s45 = int_to_ptr.vmem [resolvable:$true] %s44
      %50 = dma.hbm_to_vmem [thread:$0]  %s3, 1024, %s45, [#allocation6], 64, 64, 4
    $region17: #{tpu_custom_call.1} parent=1 // pred_fallthru
      _
    // Predicated region
    $region18: #{tpu_custom_call.1} parent=1 // pred_check
      _
    $region19: #{tpu_custom_call.1} parent=1 // pred_check_branch
      %52 = sbr.rel (0) target = $region21
    $region20: #{tpu_custom_call.1} parent=1 // pred_region
      _
    $region21: #{tpu_custom_call.1} parent=1 // pred_fallthru
      _
    // Predicated region
    $region22: #{tpu_custom_call.1} parent=1 // pred_check
      _
    $region23: #{tpu_custom_call.1} parent=1 // pred_check_branch
      %54 = sbr.rel (0) target = $region25
    $region24: #{tpu_custom_call.1} parent=1 // pred_region
      %55 = dma.done [#allocation3], 512
    $region25: #{tpu_custom_call.1} parent=1 // pred_fallthru
      _
    // Predicated region
    $region26: #{tpu_custom_call.1} parent=1 // pred_check
      _
    $region27: #{tpu_custom_call.1} parent=1 // pred_check_branch
      %57 = sbr.rel (0) target = $region29
    $region28: #{tpu_custom_call.1} parent=1 // pred_region
      %58 = dma.done [#allocation6], 1024
    $region29: #{tpu_custom_call.1} parent=1 // pred_fallthru
      _
    // Predicated region
    $region30: #{tpu_custom_call.1} parent=1 // pred_check
      _
    $region31: #{tpu_custom_call.1} parent=1 // pred_check_branch
      %60 = sbr.rel (0) target = $region33
    $region32: #{tpu_custom_call.1} parent=1 // pred_region
      %61 = dma.done [#allocation6], 1024
    $region33: #{tpu_custom_call.1} parent=1 // pred_fallthru
      _
    %v63 = vld [vmem:[#allocation2] sm:$0xff]
    %v64 = vld [vmem:[#allocation2 + $0x8] sm:$0xff]
    %v65 = vld [vmem:[#allocation2 + $0x10] sm:$0xff]
    %v66 = vld [vmem:[#allocation2 + $0x18] sm:$0xff]
    %v67 = vpack.c.bf16 %v64, %v63
    %v68 = vpack.c.bf16 %v66, %v65
    %v69 = vld [vmem:[#allocation5] sm:$0xf]
    %v70 = vld [vmem:[#allocation5 + $0x4] sm:$0xf]
    %v71 = vld [vmem:[#allocation5 + $0x8] sm:$0xf]
    %v72 = vld [vmem:[#allocation5 + $0xc] sm:$0xf]
    %v73 = vld [vmem:[#allocation5 + $0x10] sm:$0xf]
    %v74 = vld [vmem:[#allocation5 + $0x14] sm:$0xf]
    %v75 = vld [vmem:[#allocation5 + $0x18] sm:$0xf]
    %v76 = vld [vmem:[#allocation5 + $0x1c] sm:$0xf]
    %v77 = vld [vmem:[#allocation5 + $0x20] sm:$0xf]
    %v78 = vld [vmem:[#allocation5 + $0x24] sm:$0xf]
    %v79 = vld [vmem:[#allocation5 + $0x28] sm:$0xf]
    %v80 = vld [vmem:[#allocation5 + $0x2c] sm:$0xf]
    %v81 = vld [vmem:[#allocation5 + $0x30] sm:$0xf]
    %v82 = vld [vmem:[#allocation5 + $0x34] sm:$0xf]
    %v83 = vld [vmem:[#allocation5 + $0x38] sm:$0xf]
    %v84 = vld [vmem:[#allocation5 + $0x3c] sm:$0xf]
    %v85 = vld [vmem:[%s2] sm:$0x1]
    %v87 = vlaneseq
    %v88 = vshrl.u32 %v87, 7
    %v89 = vsub.s32 0, %v88
    %v90 = vrot.slane %v85, %v89
    %v108 = vunpack.c.l.b16 %v69
    %v109 = vunpack.c.l.b16 %v70
    %v110 = vunpack.c.l.b16 %v71
    %v111 = vunpack.c.l.b16 %v72
    %v112 = vunpack.c.l.b16 %v73
    %v113 = vunpack.c.l.b16 %v74
    %v114 = vunpack.c.l.b16 %v75
    %v115 = vunpack.c.l.b16 %v76
    %v116 = vunpack.c.l.b16 %v77
    %v117 = vunpack.c.l.b16 %v78
    %v118 = vunpack.c.l.b16 %v79
    %v119 = vunpack.c.l.b16 %v80
    %v120 = vunpack.c.l.b16 %v81
    %v121 = vunpack.c.l.b16 %v82
    %v122 = vunpack.c.l.b16 %v83
    %v123 = vunpack.c.l.b16 %v84
    %v124 = vpack.c.b16 %v109, %v108
    %v125 = vpack.c.b16 %v111, %v110
    %v126 = vpack.c.b16 %v113, %v112
    %v127 = vpack.c.b16 %v115, %v114
    %v128 = vpack.c.b16 %v117, %v116
    %v129 = vpack.c.b16 %v119, %v118
    %v130 = vpack.c.b16 %v121, %v120
    %v131 = vpack.c.b16 %v123, %v122
    %140 = vmatprep.subr.bf16.mxu0 0
    %141 = vmatpush1.bf16.msra.mxu0 %v124
    %142 = vmatprep.subr.bf16.mxu0 0
    %143 = vmatpush1.bf16.msra.mxu0 %v125
    %144 = vmatprep.subr.bf16.mxu0 0
    %145 = vmatpush1.bf16.msra.mxu0 %v126
    %146 = vmatprep.subr.bf16.mxu0 0
    %147 = vmatpush1.bf16.msra.mxu0 %v127
    %148 = vmatprep.subr.bf16.mxu0 0
    %149 = vmatpush1.bf16.msra.mxu0 %v128
    %150 = vmatprep.subr.bf16.mxu0 0
    %151 = vmatpush1.bf16.msra.mxu0 %v129
    %152 = vmatprep.subr.bf16.mxu0 0
    %153 = vmatpush1.bf16.msra.mxu0 %v130
    %154 = vmatprep.subr.bf16.mxu0 0
    %155 = vmatpush1.bf16.msra.mxu0 %v131
    %156 = vmatprep.subr.bf16.mxu0 0
    %157 = vmatpush1.bf16.msra.mxu0 0
    %158 = vmatprep.subr.bf16.mxu0 0
    %159 = vmatpush1.bf16.msra.mxu0 0
    %160 = vmatprep.subr.bf16.mxu0 0
    %161 = vmatpush1.bf16.msra.mxu0 0
    %162 = vmatprep.subr.bf16.mxu0 0
    %163 = vmatpush1.bf16.msra.mxu0 0
    %164 = vmatprep.subr.bf16.mxu0 0
    %165 = vmatpush1.bf16.msra.mxu0 0
    %166 = vmatprep.subr.bf16.mxu0 0
    %167 = vmatpush1.bf16.msra.mxu0 0
    %168 = vmatprep.subr.bf16.mxu0 0
    %169 = vmatpush1.bf16.msra.mxu0 0
    %170 = vmatprep.subr.bf16.mxu0 0
    %171 = vmatpush1.bf16.msra.mxu0 0
    %172 = vmatprep.mubr.bf16.mxu0 0
    %173 = vmatmul.mubr.bf16.gmra.mrb[0].mxu0 %v67
    %v174 = vpop.f32.mrb[0].mxu0
    %v175 = vadd.f32 %v90, %v174
    %v176 = vpop.f32.mrb[0].mxu0
    %v177 = vpop.f32.mrb[0].mxu0
    %v178 = vadd.f32 %v90, %v177
    %v179 = vpop.f32.mrb[0].mxu0
    %180 = vmatprep.mubr.bf16.mxu0 0
    %181 = vmatmul.mubr.bf16.gmra.mrb[0].mxu0 %v68
    %v182 = vpop.f32.mrb[0].mxu0
    %v183 = vadd.f32 %v90, %v182
    %v184 = vpop.f32.mrb[0].mxu0
    %v185 = vpop.f32.mrb[0].mxu0
    %v186 = vadd.f32 %v90, %v185
    %v187 = vpop.f32.mrb[0].mxu0
    %188 = vdwg.mxu0
    %v189 = vmax.f32 %v175, 0.0
    %v190 = vmax.f32 %v178, 0.0
    %v191 = vmax.f32 %v183, 0.0
    %v192 = vmax.f32 %v186, 0.0
    %v193 = vpack.c.bf16 %v190, %v189
    %v194 = vpack.c.bf16 %v192, %v191
    %v195 = vld [vmem:[#allocation7] sm:$0xf]
    %v196 = vld [vmem:[#allocation7 + $0x4] sm:$0xf]
    %v197 = vld [vmem:[#allocation7 + $0x8] sm:$0xf]
    %v198 = vld [vmem:[#allocation7 + $0xc] sm:$0xf]
    %v199 = vld [vmem:[#allocation7 + $0x10] sm:$0xf]
    %v200 = vld [vmem:[#allocation7 + $0x14] sm:$0xf]
    %v201 = vld [vmem:[#allocation7 + $0x18] sm:$0xf]
    %v202 = vld [vmem:[#allocation7 + $0x1c] sm:$0xf]
    %v203 = vld [vmem:[#allocation7 + $0x20] sm:$0xf]
    %v204 = vld [vmem:[#allocation7 + $0x24] sm:$0xf]
    %v205 = vld [vmem:[#allocation7 + $0x28] sm:$0xf]
    %v206 = vld [vmem:[#allocation7 + $0x2c] sm:$0xf]
    %v207 = vld [vmem:[#allocation7 + $0x30] sm:$0xf]
    %v208 = vld [vmem:[#allocation7 + $0x34] sm:$0xf]
    %v209 = vld [vmem:[#allocation7 + $0x38] sm:$0xf]
    %v210 = vld [vmem:[#allocation7 + $0x3c] sm:$0xf]
    %v211 = vld [vmem:[%s4] sm:$0x1]
    %v213 = vlaneseq
    %v214 = vshrl.u32 %v213, 7
    %v215 = vsub.s32 0, %v214
    %v216 = vrot.slane %v211, %v215
    %v234 = vunpack.c.l.b16 %v195
    %v235 = vunpack.c.l.b16 %v196
    %v236 = vunpack.c.l.b16 %v197
    %v237 = vunpack.c.l.b16 %v198
    %v238 = vunpack.c.l.b16 %v199
    %v239 = vunpack.c.l.b16 %v200
    %v240 = vunpack.c.l.b16 %v201
    %v241 = vunpack.c.l.b16 %v202
    %v242 = vunpack.c.l.b16 %v203
    %v243 = vunpack.c.l.b16 %v204
    %v244 = vunpack.c.l.b16 %v205
    %v245 = vunpack.c.l.b16 %v206
    %v246 = vunpack.c.l.b16 %v207
    %v247 = vunpack.c.l.b16 %v208
    %v248 = vunpack.c.l.b16 %v209
    %v249 = vunpack.c.l.b16 %v210
    %v250 = vpack.c.b16 %v235, %v234
    %v251 = vpack.c.b16 %v237, %v236
    %v252 = vpack.c.b16 %v239, %v238
    %v253 = vpack.c.b16 %v241, %v240
    %v254 = vpack.c.b16 %v243, %v242
    %v255 = vpack.c.b16 %v245, %v244
    %v256 = vpack.c.b16 %v247, %v246
    %v257 = vpack.c.b16 %v249, %v248
    %266 = vmatprep.subr.bf16.mxu0 0
    %267 = vmatpush1.bf16.msra.mxu0 %v250
    %268 = vmatprep.subr.bf16.mxu0 0
    %269 = vmatpush1.bf16.msra.mxu0 %v251
    %270 = vmatprep.subr.bf16.mxu0 0
    %271 = vmatpush1.bf16.msra.mxu0 %v252
    %272 = vmatprep.subr.bf16.mxu0 0
    %273 = vmatpush1.bf16.msra.mxu0 %v253
    %274 = vmatprep.subr.bf16.mxu0 0
    %275 = vmatpush1.bf16.msra.mxu0 %v254
    %276 = vmatprep.subr.bf16.mxu0 0
    %277 = vmatpush1.bf16.msra.mxu0 %v255
    %278 = vmatprep.subr.bf16.mxu0 0
    %279 = vmatpush1.bf16.msra.mxu0 %v256
    %280 = vmatprep.subr.bf16.mxu0 0
    %281 = vmatpush1.bf16.msra.mxu0 %v257
    %282 = vmatprep.subr.bf16.mxu0 0
    %283 = vmatpush1.bf16.msra.mxu0 0
    %284 = vmatprep.subr.bf16.mxu0 0
    %285 = vmatpush1.bf16.msra.mxu0 0
    %286 = vmatprep.subr.bf16.mxu0 0
    %287 = vmatpush1.bf16.msra.mxu0 0
    %288 = vmatprep.subr.bf16.mxu0 0
    %289 = vmatpush1.bf16.msra.mxu0 0
    %290 = vmatprep.subr.bf16.mxu0 0
    %291 = vmatpush1.bf16.msra.mxu0 0
    %292 = vmatprep.subr.bf16.mxu0 0
    %293 = vmatpush1.bf16.msra.mxu0 0
    %294 = vmatprep.subr.bf16.mxu0 0
    %295 = vmatpush1.bf16.msra.mxu0 0
    %296 = vmatprep.subr.bf16.mxu0 0
    %297 = vmatpush1.bf16.msra.mxu0 0
    %298 = vmatprep.mubr.bf16.mxu0 0
    %299 = vmatmul.mubr.bf16.gmra.mrb[0].mxu0 %v193
    %v300 = vpop.f32.mrb[0].mxu0
    %v301 = vadd.f32 %v216, %v300
    %v302 = vpop.f32.mrb[0].mxu0
    %v303 = vpop.f32.mrb[0].mxu0
    %v304 = vadd.f32 %v216, %v303
    %v305 = vpop.f32.mrb[0].mxu0
    %306 = vmatprep.mubr.bf16.mxu0 0
    %307 = vmatmul.mubr.bf16.gmra.mrb[0].mxu0 %v194
    %v308 = vpop.f32.mrb[0].mxu0
    %v309 = vadd.f32 %v216, %v308
    %v310 = vpop.f32.mrb[0].mxu0
    %v311 = vpop.f32.mrb[0].mxu0
    %v312 = vadd.f32 %v216, %v311
    %v313 = vpop.f32.mrb[0].mxu0
    %314 = vdwg.mxu0
    %v315 = vmax.f32 %v301, 0.0
    %v316 = vmax.f32 %v304, 0.0
    %v317 = vmax.f32 %v309, 0.0
    %v318 = vmax.f32 %v312, 0.0
    %319 = vst [vmem:[#allocation8] sm:$0xff] %v315
    %320 = vst [vmem:[#allocation8 + $0x8] sm:$0xff] %v316
    %321 = vst [vmem:[#allocation8 + $0x10] sm:$0xff] %v317
    %322 = vst [vmem:[#allocation8 + $0x18] sm:$0xff] %v318
    // Predicated region
    $region34: #{tpu_custom_call.1} parent=1 // pred_check
      _
    $region35: #{tpu_custom_call.1} parent=1 // pred_check_branch
      %324 = sbr.rel (0) target = $region37
    $region36: #{tpu_custom_call.1} parent=1 // pred_region
      %s326 = ssub.s32 512, 512
      %327 = vsyncadd [#allocation4], %s326
      %s328 = sshll.u32 [#allocation8], 4
      %s329 = int_to_ptr.vmem [resolvable:$true] %s328
      %334 = dma.vmem_to_hbm [thread:$0]  %s329, 512, %s5, [#allocation4], 128, 128, 8
    $region37: #{tpu_custom_call.1} parent=1 // pred_fallthru
      _
    // Predicated region
    $region38: #{tpu_custom_call.1} parent=1 // pred_check
      _
    $region39: #{tpu_custom_call.1} parent=1 // pred_check_branch
      %336 = sbr.rel (0) target = $region41
    $region40: #{tpu_custom_call.1} parent=1 // pred_region
      %337 = dma.done [#allocation4], 512
    $region41: #{tpu_custom_call.1} parent=1 // pred_fallthru
      _
    %338 = vsyncpa [#allocation3], 1
    %339 = vsyncpa [#allocation6], 1
    %340 = vsyncpa [#allocation4], 1

</llo_original>
